<compile_context>
chip_gen: v7x
topology: tpu7x:2x2x1
jax: 0.10.0
libtpu: 0.0.40
codegen_flags: <defaults>
</compile_context>

<pallas_src>
import jax
import jax.numpy as jnp
from jax.experimental import pallas as pl
from jax.experimental.pallas import tpu as pltpu

LANE = 128


def _round_up(n, m):
    return ((n + m - 1) // m) * m


def _pad2(a, rows, cols):
    return jnp.pad(a, ((0, rows - a.shape[0]), (0, cols - a.shape[1])))


def mapping_kernel(x_ref,
                   w0_ref, b0_ref,
                   w1_ref, b1_ref,
                   w2_ref, b2_ref,
                   w3_ref, b3_ref,
                   wh_ref, bh_ref,
                   gb_ref):
    # 4 hidden matmuls + LeakyReLU(0.2), then one fused (gamma|beta) head.
    def layer(h, w_ref, b_ref):
        y = jnp.dot(h.astype(w_ref.dtype), w_ref[...],
                    preferred_element_type=jnp.float32) + b_ref[...]
        return jnp.maximum(y, 0.2 * y)          # LeakyReLU(0.2), 2 VALU ops

    h = x_ref[...]
    h = layer(h, w0_ref, b0_ref)
    h = layer(h, w1_ref, b1_ref)
    h = layer(h, w2_ref, b2_ref)
    h = layer(h, w3_ref, b3_ref)

    gb = jnp.dot(h.astype(wh_ref.dtype), wh_ref[...],
                 preferred_element_type=jnp.float32) + bh_ref[...]
    gb_ref[...] = gb.astype(gb_ref.dtype)


def prepare_mapping_params(params, *, compute_dtype=jnp.float32):
    """Pad / cast / fuse the raw (in, out) weights ONCE.

    Hoisted out of the forward path so the per-call cost is just the
    pallas_call.  Zero padding of the hidden lane dim is mathematically inert.
    """
    dim_input, dim_hidden = params["w0"].shape
    dim_out = params["wg"].shape[1]
    d_h_p = _round_up(dim_hidden, LANE)
    head_w = _round_up(2 * dim_out, LANE)       # fused gamma|beta lane width

    cd = compute_dtype
    prepped = {
        "w0": _pad2(params["w0"], dim_input, d_h_p).astype(cd),  # K stays dim_input
        "w1": _pad2(params["w1"], d_h_p, d_h_p).astype(cd),
        "w2": _pad2(params["w2"], d_h_p, d_h_p).astype(cd),
        "w3": _pad2(params["w3"], d_h_p, d_h_p).astype(cd),
        # Concatenate gamma|beta BEFORE padding -> only head_w lanes.
        "wh": _pad2(jnp.concatenate([params["wg"], params["wb"]], axis=1),
                    d_h_p, head_w).astype(cd),
        "b0": _pad2(params["b0"], 1, d_h_p).astype(jnp.float32),
        "b1": _pad2(params["b1"], 1, d_h_p).astype(jnp.float32),
        "b2": _pad2(params["b2"], 1, d_h_p).astype(jnp.float32),
        "b3": _pad2(params["b3"], 1, d_h_p).astype(jnp.float32),
        "bh": _pad2(jnp.concatenate([params["bg"], params["bb"]], axis=1),
                    1, head_w).astype(jnp.float32),
    }
    meta = dict(dim_input=dim_input, dim_hidden=dim_hidden, dim_out=dim_out,
                d_h_p=d_h_p, head_w=head_w, compute_dtype=cd)
    return prepped, meta


def mapping_network(x, prepped, meta, *, tile_b=None, out_dtype=None):
    """Forward pass. Returns (gamma, beta), each (B, dim_out)."""
    B, dim_input = x.shape
    assert dim_input == meta["dim_input"]
    dim_out = meta["dim_out"]
    d_h_p = meta["d_h_p"]
    head_w = meta["head_w"]
    compute_dtype = meta["compute_dtype"]
    if out_dtype is None:
        out_dtype = x.dtype

    # Sublane multiple: 16 if any sub-32-bit dtype is in play, else 8.
    sub = 16 if (jnp.dtype(compute_dtype).itemsize < 4
                 or jnp.dtype(out_dtype).itemsize < 4) else 8

    # Pad batch only to the sublane multiple; ragged tail blocks are masked by
    # Pallas, so there is no round-up-to-tile_b waste.
    B_pad = _round_up(B, sub)
    if B_pad != B:
        x = jnp.pad(x, ((0, B_pad - B), (0, 0)))

    if tile_b is None:
        if B_pad <= 512:
            tile_b = B_pad                      # one big tile, single step
        else:
            # >=2 grid steps (v7x 2-TC sharding + DMA/compute overlap), tiles
            # up to 1024 rows to amortize per-step overhead (v5e/v6e).
            tile_b = min(1024, _round_up(pl.cdiv(B_pad, 2), 256))
    tile_b = max(sub, _round_up(tile_b, sub))
    tile_b = min(tile_b, B_pad)
    n_steps = pl.cdiv(B_pad, tile_b)

    def wspec(shape):
        # Grid-invariant weights/biases (index_map always (0, 0)).
        return pl.BlockSpec(shape, lambda i: (0, 0))

    in_specs = [
        pl.BlockSpec((tile_b, dim_input), lambda i: (i, 0)),   # x: no lane pad
        wspec((dim_input, d_h_p)), wspec((1, d_h_p)),
        wspec((d_h_p, d_h_p)), wspec((1, d_h_p)),
        wspec((d_h_p, d_h_p)), wspec((1, d_h_p)),
        wspec((d_h_p, d_h_p)), wspec((1, d_h_p)),
        wspec((d_h_p, head_w)), wspec((1, head_w)),
    ]
    out_specs = pl.BlockSpec((tile_b, head_w), lambda i: (i, 0))

    gb = pl.pallas_call(
        mapping_kernel,
        out_shape=jax.ShapeDtypeStruct((B_pad, head_w), out_dtype),
        grid_spec=pltpu.PrefetchScalarGridSpec(
            num_scalar_prefetch=0,
            grid=(n_steps,),
            in_specs=in_specs,
            out_specs=out_specs,
        ),
        compiler_params=pltpu.CompilerParams(
            dimension_semantics=("parallel",)),
    )(
        x,
        prepped["w0"], prepped["b0"],
        prepped["w1"], prepped["b1"],
        prepped["w2"], prepped["b2"],
        prepped["w3"], prepped["b3"],
        prepped["wh"], prepped["bh"],
    )

    gamma = gb[:B, :dim_out]
    beta = gb[:B, dim_out:2 * dim_out]
    return gamma, beta


def init_params(key, dim_input, dim_hidden, dim_out):
    """Deterministic synthetic init (PyTorch-like uniform bounds).

    Weights stored transposed, i.e. shape (in, out); biases shaped (1, out).
    """
    params = {}
    dims = [
        ("w0", "b0", dim_input, dim_hidden),
        ("w1", "b1", dim_hidden, dim_hidden),
        ("w2", "b2", dim_hidden, dim_hidden),
        ("w3", "b3", dim_hidden, dim_hidden),
        ("wg", "bg", dim_hidden, dim_out),
        ("wb", "bb", dim_hidden, dim_out),
    ]
    for wname, bname, din, dout in dims:
        key, kw, kb = jax.random.split(key, 3)
        bound = 1.0 / (din ** 0.5)
        params[wname] = jax.random.uniform(
            kw, (din, dout), jnp.float32, minval=-bound, maxval=bound)
        params[bname] = jax.random.uniform(
            kb, (1, dout), jnp.float32, minval=-bound, maxval=bound)
    return params


def mapping_network_ref(x, params):
    """Plain-JAX reference for correctness check."""
    h = x
    for name in ("0", "1", "2", "3"):
        h = h @ params["w" + name] + params["b" + name]
        h = jnp.where(h >= 0, h, 0.2 * h)
    gamma = h @ params["wg"] + params["bg"]
    beta = h @ params["wb"] + params["bb"]
    return gamma, beta


if __name__ == "__main__":
    dim_input, dim_hidden, dim_out = 32, 64, 32
    batch = 16

    key = jax.random.PRNGKey(0)
    key, kx = jax.random.split(key)
    x = jax.random.normal(kx, (batch, dim_input), jnp.float32)
    params = init_params(key, dim_input, dim_hidden, dim_out)

    g_ref, b_ref = mapping_network_ref(x, params)

    # f32-operand path, f32 output (tight tolerance).
    prep32, meta32 = prepare_mapping_params(params, compute_dtype=jnp.float32)
    gamma, beta = mapping_network(x, prep32, meta32)
    gamma = jax.block_until_ready(gamma)
    beta = jax.block_until_ready(beta)
    assert gamma.shape == (batch, dim_out) and beta.shape == (batch, dim_out)
    assert jnp.allclose(gamma, g_ref, atol=1e-4, rtol=1e-4)
    assert jnp.allclose(beta, b_ref, atol=1e-4, rtol=1e-4)

    # bf16-operand path with bf16 output (MXU-friendly + halved output bytes).
    prep16, meta16 = prepare_mapping_params(params, compute_dtype=jnp.bfloat16)
    gamma16, beta16 = mapping_network(x, prep16, meta16, out_dtype=jnp.bfloat16)
    gamma16 = jax.block_until_ready(gamma16)
    beta16 = jax.block_until_ready(beta16)
    assert jnp.allclose(gamma16.astype(jnp.float32), g_ref, atol=5e-2, rtol=5e-2)
    assert jnp.allclose(beta16.astype(jnp.float32), b_ref, atol=5e-2, rtol=5e-2)

    # Ragged batch + explicit small tile: exercises the masked tail block.
    xr = jax.random.normal(jax.random.PRNGKey(1), (batch + 5, dim_input),
                           jnp.float32)
    gr_ref, br_ref = mapping_network_ref(xr, params)
    gr, br = mapping_network(xr, prep32, meta32, tile_b=16)
    gr = jax.block_until_ready(gr)
    br = jax.block_until_ready(br)
    assert gr.shape == (batch + 5, dim_out) and br.shape == (batch + 5, dim_out)
    assert jnp.allclose(gr, gr_ref, atol=1e-4, rtol=1e-4)
    assert jnp.allclose(br, br_ref, atol=1e-4, rtol=1e-4)

    print("KERNEL_OK")
</pallas_src>

<mosaic_0001>
module attributes {stable_mosaic.version = 11 : i64} {
  func.func @mapping_kernel(%arg0: i32, %arg1: memref<16x32xf32, #tpu.memory_space<vmem>>, %arg2: memref<32x128xf32, #tpu.memory_space<vmem>>, %arg3: memref<1x128xf32, #tpu.memory_space<vmem>>, %arg4: memref<128x128xf32, #tpu.memory_space<vmem>>, %arg5: memref<1x128xf32, #tpu.memory_space<vmem>>, %arg6: memref<128x128xf32, #tpu.memory_space<vmem>>, %arg7: memref<1x128xf32, #tpu.memory_space<vmem>>, %arg8: memref<128x128xf32, #tpu.memory_space<vmem>>, %arg9: memref<1x128xf32, #tpu.memory_space<vmem>>, %arg10: memref<128x128xf32, #tpu.memory_space<vmem>>, %arg11: memref<1x128xf32, #tpu.memory_space<vmem>>, %arg12: memref<16x128xf32, #tpu.memory_space<vmem>>) attributes {dimension_semantics = [#tpu.dimension_semantics<parallel>], iteration_bounds = array<i64: 1>, scalar_prefetch = 0 : i64, scratch_operands = 0 : i64, tpu.core_type = #tpu.core_type<tc>, window_params = [{transform_indices = @transform_0, window_bounds = array<i64: 16, 32>}, {pipeline_mode = #tpu.pipeline_mode<synchronous>, transform_indices = @transform_1, window_bounds = array<i64: 32, 128>}, {pipeline_mode = #tpu.pipeline_mode<synchronous>, transform_indices = @transform_2, window_bounds = array<i64: 1, 128>}, {pipeline_mode = #tpu.pipeline_mode<synchronous>, transform_indices = @transform_3, window_bounds = array<i64: 128, 128>}, {pipeline_mode = #tpu.pipeline_mode<synchronous>, transform_indices = @transform_4, window_bounds = array<i64: 1, 128>}, {pipeline_mode = #tpu.pipeline_mode<synchronous>, transform_indices = @transform_5, window_bounds = array<i64: 128, 128>}, {pipeline_mode = #tpu.pipeline_mode<synchronous>, transform_indices = @transform_6, window_bounds = array<i64: 1, 128>}, {pipeline_mode = #tpu.pipeline_mode<synchronous>, transform_indices = @transform_7, window_bounds = array<i64: 128, 128>}, {pipeline_mode = #tpu.pipeline_mode<synchronous>, transform_indices = @transform_8, window_bounds = array<i64: 1, 128>}, {pipeline_mode = #tpu.pipeline_mode<synchronous>, transform_indices = @transform_9, window_bounds = array<i64: 128, 128>}, {pipeline_mode = #tpu.pipeline_mode<synchronous>, transform_indices = @transform_10, window_bounds = array<i64: 1, 128>}, {transform_indices = @transform_11, window_bounds = array<i64: 16, 128>}]} {
    %c0 = arith.constant 0 : index
    %c0_0 = arith.constant 0 : index
    %0 = vector.load %arg1[%c0, %c0_0] : memref<16x32xf32, #tpu.memory_space<vmem>>, vector<16x32xf32>
    %c0_1 = arith.constant 0 : index
    %c0_2 = arith.constant 0 : index
    %1 = vector.load %arg2[%c0_1, %c0_2] : memref<32x128xf32, #tpu.memory_space<vmem>>, vector<32x128xf32>
    %cst = arith.constant dense<0.000000e+00> : vector<16x128xf32>
    %2 = tpu.matmul %0, %1, %cst {dimension_numbers = #tpu.dot_dimension_numbers<[1], [0], [0], [1], [0, 0, 1, 1], [], []>} : vector<16x32xf32>, vector<32x128xf32>, vector<16x128xf32> -> vector<16x128xf32>
    %c0_3 = arith.constant 0 : index
    %c0_4 = arith.constant 0 : index
    %3 = vector.load %arg3[%c0_3, %c0_4] : memref<1x128xf32, #tpu.memory_space<vmem>>, vector<1x128xf32>
    %4 = vector.broadcast %3 : vector<1x128xf32> to vector<16x128xf32>
    %5 = arith.addf %2, %4 : vector<16x128xf32>
    %cst_5 = arith.constant 2.000000e-01 : f32
    %6 = vector.broadcast %cst_5 : f32 to vector<16x128xf32>
    %7 = arith.mulf %6, %5 : vector<16x128xf32>
    %8 = arith.maximumf %5, %7 : vector<16x128xf32>
    %c0_6 = arith.constant 0 : index
    %c0_7 = arith.constant 0 : index
    %9 = vector.load %arg4[%c0_6, %c0_7] : memref<128x128xf32, #tpu.memory_space<vmem>>, vector<128x128xf32>
    %cst_8 = arith.constant dense<0.000000e+00> : vector<16x128xf32>
    %10 = tpu.matmul %8, %9, %cst_8 {dimension_numbers = #tpu.dot_dimension_numbers<[1], [0], [0], [1], [0, 0, 1, 1], [], []>} : vector<16x128xf32>, vector<128x128xf32>, vector<16x128xf32> -> vector<16x128xf32>
    %c0_9 = arith.constant 0 : index
    %c0_10 = arith.constant 0 : index
    %11 = vector.load %arg5[%c0_9, %c0_10] : memref<1x128xf32, #tpu.memory_space<vmem>>, vector<1x128xf32>
    %12 = vector.broadcast %11 : vector<1x128xf32> to vector<16x128xf32>
    %13 = arith.addf %10, %12 : vector<16x128xf32>
    %cst_11 = arith.constant 2.000000e-01 : f32
    %14 = vector.broadcast %cst_11 : f32 to vector<16x128xf32>
    %15 = arith.mulf %14, %13 : vector<16x128xf32>
    %16 = arith.maximumf %13, %15 : vector<16x128xf32>
    %c0_12 = arith.constant 0 : index
    %c0_13 = arith.constant 0 : index
    %17 = vector.load %arg6[%c0_12, %c0_13] : memref<128x128xf32, #tpu.memory_space<vmem>>, vector<128x128xf32>
    %cst_14 = arith.constant dense<0.000000e+00> : vector<16x128xf32>
    %18 = tpu.matmul %16, %17, %cst_14 {dimension_numbers = #tpu.dot_dimension_numbers<[1], [0], [0], [1], [0, 0, 1, 1], [], []>} : vector<16x128xf32>, vector<128x128xf32>, vector<16x128xf32> -> vector<16x128xf32>
    %c0_15 = arith.constant 0 : index
    %c0_16 = arith.constant 0 : index
    %19 = vector.load %arg7[%c0_15, %c0_16] : memref<1x128xf32, #tpu.memory_space<vmem>>, vector<1x128xf32>
    %20 = vector.broadcast %19 : vector<1x128xf32> to vector<16x128xf32>
    %21 = arith.addf %18, %20 : vector<16x128xf32>
    %cst_17 = arith.constant 2.000000e-01 : f32
    %22 = vector.broadcast %cst_17 : f32 to vector<16x128xf32>
    %23 = arith.mulf %22, %21 : vector<16x128xf32>
    %24 = arith.maximumf %21, %23 : vector<16x128xf32>
    %c0_18 = arith.constant 0 : index
    %c0_19 = arith.constant 0 : index
    %25 = vector.load %arg8[%c0_18, %c0_19] : memref<128x128xf32, #tpu.memory_space<vmem>>, vector<128x128xf32>
    %cst_20 = arith.constant dense<0.000000e+00> : vector<16x128xf32>
    %26 = tpu.matmul %24, %25, %cst_20 {dimension_numbers = #tpu.dot_dimension_numbers<[1], [0], [0], [1], [0, 0, 1, 1], [], []>} : vector<16x128xf32>, vector<128x128xf32>, vector<16x128xf32> -> vector<16x128xf32>
    %c0_21 = arith.constant 0 : index
    %c0_22 = arith.constant 0 : index
    %27 = vector.load %arg9[%c0_21, %c0_22] : memref<1x128xf32, #tpu.memory_space<vmem>>, vector<1x128xf32>
    %28 = vector.broadcast %27 : vector<1x128xf32> to vector<16x128xf32>
    %29 = arith.addf %26, %28 : vector<16x128xf32>
    %cst_23 = arith.constant 2.000000e-01 : f32
    %30 = vector.broadcast %cst_23 : f32 to vector<16x128xf32>
    %31 = arith.mulf %30, %29 : vector<16x128xf32>
    %32 = arith.maximumf %29, %31 : vector<16x128xf32>
    %c0_24 = arith.constant 0 : index
    %c0_25 = arith.constant 0 : index
    %33 = vector.load %arg10[%c0_24, %c0_25] : memref<128x128xf32, #tpu.memory_space<vmem>>, vector<128x128xf32>
    %cst_26 = arith.constant dense<0.000000e+00> : vector<16x128xf32>
    %34 = tpu.matmul %32, %33, %cst_26 {dimension_numbers = #tpu.dot_dimension_numbers<[1], [0], [0], [1], [0, 0, 1, 1], [], []>} : vector<16x128xf32>, vector<128x128xf32>, vector<16x128xf32> -> vector<16x128xf32>
    %c0_27 = arith.constant 0 : index
    %c0_28 = arith.constant 0 : index
    %35 = vector.load %arg11[%c0_27, %c0_28] : memref<1x128xf32, #tpu.memory_space<vmem>>, vector<1x128xf32>
    %36 = vector.broadcast %35 : vector<1x128xf32> to vector<16x128xf32>
    %37 = arith.addf %34, %36 : vector<16x128xf32>
    %c0_29 = arith.constant 0 : index
    %c0_30 = arith.constant 0 : index
    %38 = vector.load %arg12[%c0_29, %c0_30] : memref<16x128xf32, #tpu.memory_space<vmem>>, vector<16x128xf32>
    tpu.vector_store %arg12[%c0_29, %c0_30], %37 {strides = array<i32>} : memref<16x128xf32, #tpu.memory_space<vmem>>, vector<16x128xf32>,
    return
  }
  func.func @transform_0(%arg0: i32) -> (i32, i32) {
    %c0_i32 = arith.constant 0 : i32
    %c0_i32_0 = arith.constant 0 : i32
    return %arg0, %c0_i32 : i32, i32
  }
  func.func @transform_1(%arg0: i32) -> (i32, i32) {
    %c0_i32 = arith.constant 0 : i32
    %c0_i32_0 = arith.constant 0 : i32
    %c0_i32_1 = arith.constant 0 : i32
    return %c0_i32, %c0_i32_0 : i32, i32
  }
  func.func @transform_2(%arg0: i32) -> (i32, i32) {
    %c0_i32 = arith.constant 0 : i32
    %c0_i32_0 = arith.constant 0 : i32
    %c0_i32_1 = arith.constant 0 : i32
    return %c0_i32, %c0_i32_0 : i32, i32
  }
  func.func @transform_3(%arg0: i32) -> (i32, i32) {
    %c0_i32 = arith.constant 0 : i32
    %c0_i32_0 = arith.constant 0 : i32
    %c0_i32_1 = arith.constant 0 : i32
    return %c0_i32, %c0_i32_0 : i32, i32
  }
  func.func @transform_4(%arg0: i32) -> (i32, i32) {
    %c0_i32 = arith.constant 0 : i32
    %c0_i32_0 = arith.constant 0 : i32
    %c0_i32_1 = arith.constant 0 : i32
    return %c0_i32, %c0_i32_0 : i32, i32
  }
  func.func @transform_5(%arg0: i32) -> (i32, i32) {
    %c0_i32 = arith.constant 0 : i32
    %c0_i32_0 = arith.constant 0 : i32
    %c0_i32_1 = arith.constant 0 : i32
    return %c0_i32, %c0_i32_0 : i32, i32
  }
  func.func @transform_6(%arg0: i32) -> (i32, i32) {
    %c0_i32 = arith.constant 0 : i32
    %c0_i32_0 = arith.constant 0 : i32
    %c0_i32_1 = arith.constant 0 : i32
    return %c0_i32, %c0_i32_0 : i32, i32
  }
  func.func @transform_7(%arg0: i32) -> (i32, i32) {
    %c0_i32 = arith.constant 0 : i32
    %c0_i32_0 = arith.constant 0 : i32
    %c0_i32_1 = arith.constant 0 : i32
    return %c0_i32, %c0_i32_0 : i32, i32
  }
  func.func @transform_8(%arg0: i32) -> (i32, i32) {
    %c0_i32 = arith.constant 0 : i32
    %c0_i32_0 = arith.constant 0 : i32
    %c0_i32_1 = arith.constant 0 : i32
    return %c0_i32, %c0_i32_0 : i32, i32
  }
  func.func @transform_9(%arg0: i32) -> (i32, i32) {
    %c0_i32 = arith.constant 0 : i32
    %c0_i32_0 = arith.constant 0 : i32
    %c0_i32_1 = arith.constant 0 : i32
    return %c0_i32, %c0_i32_0 : i32, i32
  }
  func.func @transform_10(%arg0: i32) -> (i32, i32) {
    %c0_i32 = arith.constant 0 : i32
    %c0_i32_0 = arith.constant 0 : i32
    %c0_i32_1 = arith.constant 0 : i32
    return %c0_i32, %c0_i32_0 : i32, i32
  }
  func.func @transform_11(%arg0: i32) -> (i32, i32) {
    %c0_i32 = arith.constant 0 : i32
    %c0_i32_0 = arith.constant 0 : i32
    return %arg0, %c0_i32 : i32, i32
  }
}

</mosaic_0001>

<llo_original>
// kernel: tpu_custom_call.1
$region0: #{tpu_custom_call.1}
  #allocation0 [shape = 'u32[]', space=smem, size = 0x4, offset = 0x4, fixed_abs, tag = 'smem constant byte address 0x4 - core index']
  #allocation1 [shape = 'u32[144,128]{1,0:T(1,128)}', space=vmem, size = 0x12000, scoped, tag = 'internal scratch']
  %s0 = inlined_call_operand.hbm [shape: f32[16,32], index: 0, kind: input, shape index: {}]
  %s1 = inlined_call_operand.hbm [shape: f32[32,128], index: 1, kind: input, shape index: {}]
  %s2 = inlined_call_operand.vmem [shape: f32[1,128], index: 2, kind: input, shape index: {}]
  %s3 = inlined_call_operand.hbm [shape: f32[128,128], index: 3, kind: input, shape index: {}]
  %s4 = inlined_call_operand.vmem [shape: f32[1,128], index: 4, kind: input, shape index: {}]
  %s5 = inlined_call_operand.hbm [shape: f32[128,128], index: 5, kind: input, shape index: {}]
  %s6 = inlined_call_operand.vmem [shape: f32[1,128], index: 6, kind: input, shape index: {}]
  %s7 = inlined_call_operand.hbm [shape: f32[128,128], index: 7, kind: input, shape index: {}]
  %s8 = inlined_call_operand.vmem [shape: f32[1,128], index: 8, kind: input, shape index: {}]
  %s9 = inlined_call_operand.hbm [shape: f32[128,128], index: 9, kind: input, shape index: {}]
  %s10 = inlined_call_operand.vmem [shape: f32[1,128], index: 10, kind: input, shape index: {}]
  %s11 = inlined_call_operand.hbm [shape: f32[16,128], index: 11, kind: output, shape index: {}]
  %s12 = sld [smem:[#allocation0]]
  $region78: #{tpu_custom_call.1} parent=0
    _
  %s14 = ssub.s32 1, %s12
  %s15 = scalar_select 0, %s14, %s12
  $region1: #{tpu_custom_call.1} parent=0
    #allocation2 [shape = 'u8[8192]{0}', space=vmem, size = 0x2000, scoped, tag = 'input window, operand 0, single buffered']
    #allocation3 [shape = 's32[1]{0}', space=sflag, size = 0x4, scoped, tag = 'scoped memory for tpu_custom_call.1']
    #allocation4 [shape = 's32[1]{0}', space=sflag, size = 0x4, scoped, tag = 'scoped memory for tpu_custom_call.1']
    #allocation5 [shape = 'u8[16384]{0}', space=vmem, size = 0x4000, scoped, tag = 'input window, operand 1, single buffered']
    #allocation6 [shape = 's32[1]{0}', space=sflag, size = 0x4, scoped, tag = 'scoped memory for tpu_custom_call.1']
    #allocation7 [shape = 'u8[65536]{0}', space=vmem, size = 0x10000, scoped, tag = 'input window, operand 3, single buffered']
    #allocation8 [shape = 'u8[65536]{0}', space=vmem, size = 0x10000, scoped, tag = 'input window, operand 5, single buffered']
    #allocation9 [shape = 's32[1]{0}', space=sflag, size = 0x4, scoped, tag = 'scoped memory for tpu_custom_call.1']
    #allocation10 [shape = 'u8[65536]{0}', space=vmem, size = 0x10000, scoped, tag = 'input window, operand 7, single buffered']
    #allocation11 [shape = 'u8[65536]{0}', space=vmem, size = 0x10000, scoped, tag = 'input window, operand 9, single buffered']
    #allocation12 [shape = 's32[1]{0}', space=sflag, size = 0x4, scoped, tag = 'scoped memory for tpu_custom_call.1']
    #allocation13 [shape = 'u8[8192]{0}', space=vmem, size = 0x2000, scoped, tag = 'output window, operand 0, single buffered']
    %16 = vsyncpa [#allocation3], 0
    %17 = vsyncpa [#allocation6], 0
    %18 = vsyncpa [#allocation9], 0
    %19 = vsyncpa [#allocation12], 0
    %20 = vsyncpa [#allocation4], 0
    // Predicated region
    $region2: #{tpu_custom_call.1} parent=1 // pred_check
      _
    $region3: #{tpu_custom_call.1} parent=1 // pred_check_branch
      %22 = sbr.rel (0) target = $region5
    $region4: #{tpu_custom_call.1} parent=1 // pred_region
      %s24 = ssub.s32 256, 256
      %25 = vsyncadd [#allocation3], %s24
      %s26 = sshll.u32 [#allocation2], 4
      %s27 = int_to_ptr.vmem [resolvable:$true] %s26
      %32 = dma.hbm_to_vmem [thread:$0]  %s0, 256, %s27, [#allocation3], 128, 128, 8
    $region5: #{tpu_custom_call.1} parent=1 // pred_fallthru
      _
    // Predicated region
    $region6: #{tpu_custom_call.1} parent=1 // pred_check
      _
    $region7: #{tpu_custom_call.1} parent=1 // pred_check_branch
      %34 = sbr.rel (0) target = $region9
    $region8: #{tpu_custom_call.1} parent=1 // pred_region
      %s36 = ssub.s32 512, 512
      %37 = vsyncadd [#allocation6], %s36
      %s38 = sshll.u32 [#allocation5], 4
      %s39 = int_to_ptr.vmem [resolvable:$true] %s38
      %44 = dma.hbm_to_vmem [thread:$0]  %s1, 512, %s39, [#allocation6], 128, 128, 8
    $region9: #{tpu_custom_call.1} parent=1 // pred_fallthru
      _
    // Predicated region
    $region10: #{tpu_custom_call.1} parent=1 // pred_check
      _
    $region11: #{tpu_custom_call.1} parent=1 // pred_check_branch
      %46 = sbr.rel (0) target = $region13
    $region12: #{tpu_custom_call.1} parent=1 // pred_region
      _
    $region13: #{tpu_custom_call.1} parent=1 // pred_fallthru
      _
    // Predicated region
    $region14: #{tpu_custom_call.1} parent=1 // pred_check
      _
    $region15: #{tpu_custom_call.1} parent=1 // pred_check_branch
      %48 = sbr.rel (0) target = $region17
    $region16: #{tpu_custom_call.1} parent=1 // pred_region
      %s50 = ssub.s32 2048, 2048
      %51 = vsyncadd [#allocation6], %s50
      %s52 = sshll.u32 [#allocation7], 4
      %s53 = int_to_ptr.vmem [resolvable:$true] %s52
      %58 = dma.hbm_to_vmem [thread:$0]  %s3, 2048, %s53, [#allocation6], 128, 128, 8
    $region17: #{tpu_custom_call.1} parent=1 // pred_fallthru
      _
    // Predicated region
    $region18: #{tpu_custom_call.1} parent=1 // pred_check
      _
    $region19: #{tpu_custom_call.1} parent=1 // pred_check_branch
      %60 = sbr.rel (0) target = $region21
    $region20: #{tpu_custom_call.1} parent=1 // pred_region
      _
    $region21: #{tpu_custom_call.1} parent=1 // pred_fallthru
      _
    // Predicated region
    $region22: #{tpu_custom_call.1} parent=1 // pred_check
      _
    $region23: #{tpu_custom_call.1} parent=1 // pred_check_branch
      %62 = sbr.rel (0) target = $region25
    $region24: #{tpu_custom_call.1} parent=1 // pred_region
      %s64 = ssub.s32 2048, 2048
      %65 = vsyncadd [#allocation9], %s64
      %s66 = sshll.u32 [#allocation8], 4
      %s67 = int_to_ptr.vmem [resolvable:$true] %s66
      %72 = dma.hbm_to_vmem [thread:$0]  %s5, 2048, %s67, [#allocation9], 128, 128, 8
    $region25: #{tpu_custom_call.1} parent=1 // pred_fallthru
      _
    // Predicated region
    $region26: #{tpu_custom_call.1} parent=1 // pred_check
      _
    $region27: #{tpu_custom_call.1} parent=1 // pred_check_branch
      %74 = sbr.rel (0) target = $region29
    $region28: #{tpu_custom_call.1} parent=1 // pred_region
      _
    $region29: #{tpu_custom_call.1} parent=1 // pred_fallthru
      _
    // Predicated region
    $region30: #{tpu_custom_call.1} parent=1 // pred_check
      _
    $region31: #{tpu_custom_call.1} parent=1 // pred_check_branch
      %76 = sbr.rel (0) target = $region33
    $region32: #{tpu_custom_call.1} parent=1 // pred_region
      %s78 = ssub.s32 2048, 2048
      %79 = vsyncadd [#allocation9], %s78
      %s80 = sshll.u32 [#allocation10], 4
      %s81 = int_to_ptr.vmem [resolvable:$true] %s80
      %86 = dma.hbm_to_vmem [thread:$0]  %s7, 2048, %s81, [#allocation9], 128, 128, 8
    $region33: #{tpu_custom_call.1} parent=1 // pred_fallthru
      _
    // Predicated region
    $region34: #{tpu_custom_call.1} parent=1 // pred_check
      _
    $region35: #{tpu_custom_call.1} parent=1 // pred_check_branch
      %88 = sbr.rel (0) target = $region37
    $region36: #{tpu_custom_call.1} parent=1 // pred_region
      _
    $region37: #{tpu_custom_call.1} parent=1 // pred_fallthru
      _
    // Predicated region
    $region38: #{tpu_custom_call.1} parent=1 // pred_check
      _
    $region39: #{tpu_custom_call.1} parent=1 // pred_check_branch
      %90 = sbr.rel (0) target = $region41
    $region40: #{tpu_custom_call.1} parent=1 // pred_region
      %s92 = ssub.s32 2048, 2048
      %93 = vsyncadd [#allocation12], %s92
      %s94 = sshll.u32 [#allocation11], 4
      %s95 = int_to_ptr.vmem [resolvable:$true] %s94
      %100 = dma.hbm_to_vmem [thread:$0]  %s9, 2048, %s95, [#allocation12], 128, 128, 8
    $region41: #{tpu_custom_call.1} parent=1 // pred_fallthru
      _
    // Predicated region
    $region42: #{tpu_custom_call.1} parent=1 // pred_check
      _
    $region43: #{tpu_custom_call.1} parent=1 // pred_check_branch
      %102 = sbr.rel (0) target = $region45
    $region44: #{tpu_custom_call.1} parent=1 // pred_region
      _
    $region45: #{tpu_custom_call.1} parent=1 // pred_fallthru
      _
    // Predicated region
    $region46: #{tpu_custom_call.1} parent=1 // pred_check
      _
    $region47: #{tpu_custom_call.1} parent=1 // pred_check_branch
      %104 = sbr.rel (0) target = $region49
    $region48: #{tpu_custom_call.1} parent=1 // pred_region
      %105 = dma.done [#allocation3], 256
    $region49: #{tpu_custom_call.1} parent=1 // pred_fallthru
      _
    // Predicated region
    $region50: #{tpu_custom_call.1} parent=1 // pred_check
      _
    $region51: #{tpu_custom_call.1} parent=1 // pred_check_branch
      %107 = sbr.rel (0) target = $region53
    $region52: #{tpu_custom_call.1} parent=1 // pred_region
      %108 = dma.done [#allocation6], 512
    $region53: #{tpu_custom_call.1} parent=1 // pred_fallthru
      _
    // Predicated region
    $region54: #{tpu_custom_call.1} parent=1 // pred_check
      _
    $region55: #{tpu_custom_call.1} parent=1 // pred_check_branch
      %110 = sbr.rel (0) target = $region57
    $region56: #{tpu_custom_call.1} parent=1 // pred_region
      %111 = dma.done [#allocation6], 2048
    $region57: #{tpu_custom_call.1} parent=1 // pred_fallthru
      _
    // Predicated region
    $region58: #{tpu_custom_call.1} parent=1 // pred_check
      _
    $region59: #{tpu_custom_call.1} parent=1 // pred_check_branch
      %113 = sbr.rel (0) target = $region61
    $region60: #{tpu_custom_call.1} parent=1 // pred_region
      %114 = dma.done [#allocation9], 2048
    $region61: #{tpu_custom_call.1} parent=1 // pred_fallthru
      _
    // Predicated region
    $region62: #{tpu_custom_call.1} parent=1 // pred_check
      _
    $region63: #{tpu_custom_call.1} parent=1 // pred_check_branch
      %116 = sbr.rel (0) target = $region65
    $region64: #{tpu_custom_call.1} parent=1 // pred_region
      %117 = dma.done [#allocation9], 2048
    $region65: #{tpu_custom_call.1} parent=1 // pred_fallthru
      _
    // Predicated region
    $region66: #{tpu_custom_call.1} parent=1 // pred_check
      _
    $region67: #{tpu_custom_call.1} parent=1 // pred_check_branch
      %119 = sbr.rel (0) target = $region69
    $region68: #{tpu_custom_call.1} parent=1 // pred_region
      %120 = dma.done [#allocation12], 2048
    $region69: #{tpu_custom_call.1} parent=1 // pred_fallthru
      _
    %v121 = vld [vmem:[#allocation2] sm:$0xff]
    %v122 = vld [vmem:[#allocation2 + $0x8] sm:$0xff]
    %v123 = vld [vmem:[#allocation5] sm:$0xff]
    %v124 = vld [vmem:[#allocation5 + $0x8] sm:$0xff]
    %v125 = vld [vmem:[#allocation5 + $0x10] sm:$0xff]
    %v126 = vld [vmem:[#allocation5 + $0x18] sm:$0xff]
    %v127 = vld [vmem:[%s2] sm:$0x1]
    %v129 = vlaneseq
    %v130 = vshrl.u32 %v129, 7
    %v131 = vsub.s32 0, %v130
    %v132 = vrot.slane %v127, %v131
    %vm134 = vcmask 261120
    %v136 = vsel %vm134, %v121, 0
    %v139 = vsel %vm134, %v122, 0
    %141 = vmatprep.subr.mxu0 0.0
    %142 = vmatpush1.msra.mxu0 %v123
    %143 = vmatprep.subr.mxu0 0.0
    %144 = vmatpush1.msra.mxu0 %v124
    %145 = vmatprep.subr.mxu0 0.0
    %146 = vmatpush1.msra.mxu0 %v125
    %147 = vmatprep.subr.mxu0 0.0
    %148 = vmatpush1.msra.mxu0 %v126
    %149 = vmatprep.subr.mxu0 0.0
    %150 = vmatpush1.msra.mxu0 0.0
    %151 = vmatprep.subr.mxu0 0.0
    %152 = vmatpush1.msra.mxu0 0.0
    %153 = vmatprep.subr.mxu0 0.0
    %154 = vmatpush1.msra.mxu0 0.0
    %155 = vmatprep.subr.mxu0 0.0
    %156 = vmatpush1.msra.mxu0 0.0
    %157 = vmatprep.subr.mxu0 0.0
    %158 = vmatpush1.msra.mxu0 0.0
    %159 = vmatprep.subr.mxu0 0.0
    %160 = vmatpush1.msra.mxu0 0.0
    %161 = vmatprep.subr.mxu0 0.0
    %162 = vmatpush1.msra.mxu0 0.0
    %163 = vmatprep.subr.mxu0 0.0
    %164 = vmatpush1.msra.mxu0 0.0
    %165 = vmatprep.subr.mxu0 0.0
    %166 = vmatpush1.msra.mxu0 0.0
    %167 = vmatprep.subr.mxu0 0.0
    %168 = vmatpush1.msra.mxu0 0.0
    %169 = vmatprep.subr.mxu0 0.0
    %170 = vmatpush1.msra.mxu0 0.0
    %171 = vmatprep.subr.mxu0 0.0
    %172 = vmatpush1.msra.mxu0 0.0
    %173 = vmatprep.subr.mxu0 0.0
    %174 = vmatpush1.msra.mxu0 0.0
    %175 = vmatprep.subr.mxu0 0.0
    %176 = vmatpush1.msra.mxu0 0.0
    %177 = vmatprep.subr.mxu0 0.0
    %178 = vmatpush1.msra.mxu0 0.0
    %179 = vmatprep.subr.mxu0 0.0
    %180 = vmatpush1.msra.mxu0 0.0
    %181 = vmatprep.subr.mxu0 0.0
    %182 = vmatpush1.msra.mxu0 0.0
    %183 = vmatprep.subr.mxu0 0.0
    %184 = vmatpush1.msra.mxu0 0.0
    %185 = vmatprep.subr.mxu0 0.0
    %186 = vmatpush1.msra.mxu0 0.0
    %187 = vmatprep.subr.mxu0 0.0
    %188 = vmatpush1.msra.mxu0 0.0
    %189 = vmatprep.subr.mxu0 0.0
    %190 = vmatpush1.msra.mxu0 0.0
    %191 = vmatprep.subr.mxu0 0.0
    %192 = vmatpush1.msra.mxu0 0.0
    %193 = vmatprep.subr.mxu0 0.0
    %194 = vmatpush1.msra.mxu0 0.0
    %195 = vmatprep.subr.mxu0 0.0
    %196 = vmatpush1.msra.mxu0 0.0
    %197 = vmatprep.subr.mxu0 0.0
    %198 = vmatpush1.msra.mxu0 0.0
    %199 = vmatprep.subr.mxu0 0.0
    %200 = vmatpush1.msra.mxu0 0.0
    %201 = vmatprep.subr.mxu0 0.0
    %202 = vmatpush1.msra.mxu0 0.0
    %203 = vmatprep.subr.mxu0 0.0
    %204 = vmatpush1.msra.mxu0 0.0
    %205 = vmatprep.mubr.f32.mxu0 0.0
    %206 = vmatmul.mubr.f32.gmra.mrb[0].mxu0 %v136
    %v207 = vpop.f32.mrb[0].mxu0
    %v208 = vadd.f32 %v132, %v207
    %v209 = vpop.f32.mrb[0].mxu0
    %210 = vmatprep.mubr.f32.mxu0 0.0
    %211 = vmatmul.mubr.f32.gmra.mrb[0].mxu0 %v139
    %v212 = vpop.f32.mrb[0].mxu0
    %v213 = vadd.f32 %v132, %v212
    %v214 = vpop.f32.mrb[0].mxu0
    %215 = vdwg.mxu0
    %v216 = vmul.f32 %v208, 0.2
    %v217 = vmul.f32 %v213, 0.2
    %v218 = vmax.f32 %v208, %v216
    %v219 = vmax.f32 %v213, %v217
    %v220 = vld [vmem:[#allocation7] sm:$0xff]
    %v221 = vld [vmem:[#allocation7 + $0x8] sm:$0xff]
    %v222 = vld [vmem:[#allocation7 + $0x10] sm:$0xff]
    %v223 = vld [vmem:[#allocation7 + $0x18] sm:$0xff]
    %v224 = vld [vmem:[#allocation7 + $0x20] sm:$0xff]
    %v225 = vld [vmem:[#allocation7 + $0x28] sm:$0xff]
    %v226 = vld [vmem:[#allocation7 + $0x30] sm:$0xff]
    %v227 = vld [vmem:[#allocation7 + $0x38] sm:$0xff]
    %v228 = vld [vmem:[#allocation7 + $0x40] sm:$0xff]
    %v229 = vld [vmem:[#allocation7 + $0x48] sm:$0xff]
    %v230 = vld [vmem:[#allocation7 + $0x50] sm:$0xff]
    %v231 = vld [vmem:[#allocation7 + $0x58] sm:$0xff]
    %v232 = vld [vmem:[#allocation7 + $0x60] sm:$0xff]
    %v233 = vld [vmem:[#allocation7 + $0x68] sm:$0xff]
    %v234 = vld [vmem:[#allocation7 + $0x70] sm:$0xff]
    %v235 = vld [vmem:[#allocation7 + $0x78] sm:$0xff]
    %v236 = vld [vmem:[%s4] sm:$0x1]
    %v238 = vlaneseq
    %v239 = vshrl.u32 %v238, 7
    %v240 = vsub.s32 0, %v239
    %v241 = vrot.slane %v236, %v240
    %243 = vmatprep.subr.mxu0 0.0
    %244 = vmatpush1.msra.mxu0 %v220
    %245 = vmatprep.subr.mxu0 0.0
    %246 = vmatpush1.msra.mxu0 %v221
    %247 = vmatprep.subr.mxu0 0.0
    %248 = vmatpush1.msra.mxu0 %v222
    %249 = vmatprep.subr.mxu0 0.0
    %250 = vmatpush1.msra.mxu0 %v223
    %251 = vmatprep.subr.mxu0 0.0
    %252 = vmatpush1.msra.mxu0 %v224
    %253 = vmatprep.subr.mxu0 0.0
    %254 = vmatpush1.msra.mxu0 %v225
    %255 = vmatprep.subr.mxu0 0.0
    %256 = vmatpush1.msra.mxu0 %v226
    %257 = vmatprep.subr.mxu0 0.0
    %258 = vmatpush1.msra.mxu0 %v227
    %259 = vmatprep.subr.mxu0 0.0
    %260 = vmatpush1.msra.mxu0 %v228
    %261 = vmatprep.subr.mxu0 0.0
    %262 = vmatpush1.msra.mxu0 %v229
    %263 = vmatprep.subr.mxu0 0.0
    %264 = vmatpush1.msra.mxu0 %v230
    %265 = vmatprep.subr.mxu0 0.0
    %266 = vmatpush1.msra.mxu0 %v231
    %267 = vmatprep.subr.mxu0 0.0
    %268 = vmatpush1.msra.mxu0 %v232
    %269 = vmatprep.subr.mxu0 0.0
    %270 = vmatpush1.msra.mxu0 %v233
    %271 = vmatprep.subr.mxu0 0.0
    %272 = vmatpush1.msra.mxu0 %v234
    %273 = vmatprep.subr.mxu0 0.0
    %274 = vmatpush1.msra.mxu0 %v235
    %275 = vmatprep.subr.mxu0 0.0
    %276 = vmatpush1.msra.mxu0 0.0
    %277 = vmatprep.subr.mxu0 0.0
    %278 = vmatpush1.msra.mxu0 0.0
    %279 = vmatprep.subr.mxu0 0.0
    %280 = vmatpush1.msra.mxu0 0.0
    %281 = vmatprep.subr.mxu0 0.0
    %282 = vmatpush1.msra.mxu0 0.0
    %283 = vmatprep.subr.mxu0 0.0
    %284 = vmatpush1.msra.mxu0 0.0
    %285 = vmatprep.subr.mxu0 0.0
    %286 = vmatpush1.msra.mxu0 0.0
    %287 = vmatprep.subr.mxu0 0.0
    %288 = vmatpush1.msra.mxu0 0.0
    %289 = vmatprep.subr.mxu0 0.0
    %290 = vmatpush1.msra.mxu0 0.0
    %291 = vmatprep.subr.mxu0 0.0
    %292 = vmatpush1.msra.mxu0 0.0
    %293 = vmatprep.subr.mxu0 0.0
    %294 = vmatpush1.msra.mxu0 0.0
    %295 = vmatprep.subr.mxu0 0.0
    %296 = vmatpush1.msra.mxu0 0.0
    %297 = vmatprep.subr.mxu0 0.0
    %298 = vmatpush1.msra.mxu0 0.0
    %299 = vmatprep.subr.mxu0 0.0
    %300 = vmatpush1.msra.mxu0 0.0
    %301 = vmatprep.subr.mxu0 0.0
    %302 = vmatpush1.msra.mxu0 0.0
    %303 = vmatprep.subr.mxu0 0.0
    %304 = vmatpush1.msra.mxu0 0.0
    %305 = vmatprep.subr.mxu0 0.0
    %306 = vmatpush1.msra.mxu0 0.0
    %307 = vmatprep.mubr.f32.mxu0 0.0
    %308 = vmatmul.mubr.f32.gmra.mrb[0].mxu0 %v218
    %v309 = vpop.f32.mrb[0].mxu0
    %v310 = vadd.f32 %v241, %v309
    %v311 = vpop.f32.mrb[0].mxu0
    %312 = vmatprep.mubr.f32.mxu0 0.0
    %313 = vmatmul.mubr.f32.gmra.mrb[0].mxu0 %v219
    %v314 = vpop.f32.mrb[0].mxu0
    %v315 = vadd.f32 %v241, %v314
    %v316 = vpop.f32.mrb[0].mxu0
    %317 = vdwg.mxu0
    %v318 = vmul.f32 %v310, 0.2
    %v319 = vmul.f32 %v315, 0.2
    %v320 = vmax.f32 %v310, %v318
    %v321 = vmax.f32 %v315, %v319
    %v322 = vld [vmem:[#allocation8] sm:$0xff]
    %v323 = vld [vmem:[#allocation8 + $0x8] sm:$0xff]
    %v324 = vld [vmem:[#allocation8 + $0x10] sm:$0xff]
    %v325 = vld [vmem:[#allocation8 + $0x18] sm:$0xff]
    %v326 = vld [vmem:[#allocation8 + $0x20] sm:$0xff]
    %v327 = vld [vmem:[#allocation8 + $0x28] sm:$0xff]
    %v328 = vld [vmem:[#allocation8 + $0x30] sm:$0xff]
    %v329 = vld [vmem:[#allocation8 + $0x38] sm:$0xff]
    %v330 = vld [vmem:[#allocation8 + $0x40] sm:$0xff]
    %v331 = vld [vmem:[#allocation8 + $0x48] sm:$0xff]
    %v332 = vld [vmem:[#allocation8 + $0x50] sm:$0xff]
    %v333 = vld [vmem:[#allocation8 + $0x58] sm:$0xff]
    %v334 = vld [vmem:[#allocation8 + $0x60] sm:$0xff]
    %v335 = vld [vmem:[#allocation8 + $0x68] sm:$0xff]
    %v336 = vld [vmem:[#allocation8 + $0x70] sm:$0xff]
    %v337 = vld [vmem:[#allocation8 + $0x78] sm:$0xff]
    %v338 = vld [vmem:[%s6] sm:$0x1]
    %v340 = vlaneseq
    %v341 = vshrl.u32 %v340, 7
    %v342 = vsub.s32 0, %v341
    %v343 = vrot.slane %v338, %v342
    %345 = vmatprep.subr.mxu0 0.0
    %346 = vmatpush1.msra.mxu0 %v322
    %347 = vmatprep.subr.mxu0 0.0
    %348 = vmatpush1.msra.mxu0 %v323
    %349 = vmatprep.subr.mxu0 0.0
    %350 = vmatpush1.msra.mxu0 %v324
    %351 = vmatprep.subr.mxu0 0.0
    %352 = vmatpush1.msra.mxu0 %v325
    %353 = vmatprep.subr.mxu0 0.0
    %354 = vmatpush1.msra.mxu0 %v326
    %355 = vmatprep.subr.mxu0 0.0
    %356 = vmatpush1.msra.mxu0 %v327
    %357 = vmatprep.subr.mxu0 0.0
    %358 = vmatpush1.msra.mxu0 %v328
    %359 = vmatprep.subr.mxu0 0.0
    %360 = vmatpush1.msra.mxu0 %v329
    %361 = vmatprep.subr.mxu0 0.0
    %362 = vmatpush1.msra.mxu0 %v330
    %363 = vmatprep.subr.mxu0 0.0
    %364 = vmatpush1.msra.mxu0 %v331
    %365 = vmatprep.subr.mxu0 0.0
    %366 = vmatpush1.msra.mxu0 %v332
    %367 = vmatprep.subr.mxu0 0.0
    %368 = vmatpush1.msra.mxu0 %v333
    %369 = vmatprep.subr.mxu0 0.0
    %370 = vmatpush1.msra.mxu0 %v334
    %371 = vmatprep.subr.mxu0 0.0
    %372 = vmatpush1.msra.mxu0 %v335
    %373 = vmatprep.subr.mxu0 0.0
    %374 = vmatpush1.msra.mxu0 %v336
    %375 = vmatprep.subr.mxu0 0.0
    %376 = vmatpush1.msra.mxu0 %v337
    %377 = vmatprep.subr.mxu0 0.0
    %378 = vmatpush1.msra.mxu0 0.0
    %379 = vmatprep.subr.mxu0 0.0
    %380 = vmatpush1.msra.mxu0 0.0
    %381 = vmatprep.subr.mxu0 0.0
    %382 = vmatpush1.msra.mxu0 0.0
    %383 = vmatprep.subr.mxu0 0.0
    %384 = vmatpush1.msra.mxu0 0.0
    %385 = vmatprep.subr.mxu0 0.0
    %386 = vmatpush1.msra.mxu0 0.0
    %387 = vmatprep.subr.mxu0 0.0
    %388 = vmatpush1.msra.mxu0 0.0
    %389 = vmatprep.subr.mxu0 0.0
    %390 = vmatpush1.msra.mxu0 0.0
    %391 = vmatprep.subr.mxu0 0.0
    %392 = vmatpush1.msra.mxu0 0.0
    %393 = vmatprep.subr.mxu0 0.0
    %394 = vmatpush1.msra.mxu0 0.0
    %395 = vmatprep.subr.mxu0 0.0
    %396 = vmatpush1.msra.mxu0 0.0
    %397 = vmatprep.subr.mxu0 0.0
    %398 = vmatpush1.msra.mxu0 0.0
    %399 = vmatprep.subr.mxu0 0.0
    %400 = vmatpush1.msra.mxu0 0.0
    %401 = vmatprep.subr.mxu0 0.0
    %402 = vmatpush1.msra.mxu0 0.0
    %403 = vmatprep.subr.mxu0 0.0
    %404 = vmatpush1.msra.mxu0 0.0
    %405 = vmatprep.subr.mxu0 0.0
    %406 = vmatpush1.msra.mxu0 0.0
    %407 = vmatprep.subr.mxu0 0.0
    %408 = vmatpush1.msra.mxu0 0.0
    %409 = vmatprep.mubr.f32.mxu0 0.0
    %410 = vmatmul.mubr.f32.gmra.mrb[0].mxu0 %v320
    %v411 = vpop.f32.mrb[0].mxu0
    %v412 = vadd.f32 %v343, %v411
    %v413 = vpop.f32.mrb[0].mxu0
    %414 = vmatprep.mubr.f32.mxu0 0.0
    %415 = vmatmul.mubr.f32.gmra.mrb[0].mxu0 %v321
    %v416 = vpop.f32.mrb[0].mxu0
    %v417 = vadd.f32 %v343, %v416
    %v418 = vpop.f32.mrb[0].mxu0
    %419 = vdwg.mxu0
    %v420 = vmul.f32 %v412, 0.2
    %v421 = vmul.f32 %v417, 0.2
    %v422 = vmax.f32 %v412, %v420
    %v423 = vmax.f32 %v417, %v421
    %v424 = vld [vmem:[#allocation10] sm:$0xff]
    %v425 = vld [vmem:[#allocation10 + $0x8] sm:$0xff]
    %v426 = vld [vmem:[#allocation10 + $0x10] sm:$0xff]
    %v427 = vld [vmem:[#allocation10 + $0x18] sm:$0xff]
    %v428 = vld [vmem:[#allocation10 + $0x20] sm:$0xff]
    %v429 = vld [vmem:[#allocation10 + $0x28] sm:$0xff]
    %v430 = vld [vmem:[#allocation10 + $0x30] sm:$0xff]
    %v431 = vld [vmem:[#allocation10 + $0x38] sm:$0xff]
    %v432 = vld [vmem:[#allocation10 + $0x40] sm:$0xff]
    %v433 = vld [vmem:[#allocation10 + $0x48] sm:$0xff]
    %v434 = vld [vmem:[#allocation10 + $0x50] sm:$0xff]
    %v435 = vld [vmem:[#allocation10 + $0x58] sm:$0xff]
    %v436 = vld [vmem:[#allocation10 + $0x60] sm:$0xff]
    %v437 = vld [vmem:[#allocation10 + $0x68] sm:$0xff]
    %v438 = vld [vmem:[#allocation10 + $0x70] sm:$0xff]
    %v439 = vld [vmem:[#allocation10 + $0x78] sm:$0xff]
    %v440 = vld [vmem:[%s8] sm:$0x1]
    %v442 = vlaneseq
    %v443 = vshrl.u32 %v442, 7
    %v444 = vsub.s32 0, %v443
    %v445 = vrot.slane %v440, %v444
    %447 = vmatprep.subr.mxu0 0.0
    %448 = vmatpush1.msra.mxu0 %v424
    %449 = vmatprep.subr.mxu0 0.0
    %450 = vmatpush1.msra.mxu0 %v425
    %451 = vmatprep.subr.mxu0 0.0
    %452 = vmatpush1.msra.mxu0 %v426
    %453 = vmatprep.subr.mxu0 0.0
    %454 = vmatpush1.msra.mxu0 %v427
    %455 = vmatprep.subr.mxu0 0.0
    %456 = vmatpush1.msra.mxu0 %v428
    %457 = vmatprep.subr.mxu0 0.0
    %458 = vmatpush1.msra.mxu0 %v429
    %459 = vmatprep.subr.mxu0 0.0
    %460 = vmatpush1.msra.mxu0 %v430
    %461 = vmatprep.subr.mxu0 0.0
    %462 = vmatpush1.msra.mxu0 %v431
    %463 = vmatprep.subr.mxu0 0.0
    %464 = vmatpush1.msra.mxu0 %v432
    %465 = vmatprep.subr.mxu0 0.0
    %466 = vmatpush1.msra.mxu0 %v433
    %467 = vmatprep.subr.mxu0 0.0
    %468 = vmatpush1.msra.mxu0 %v434
    %469 = vmatprep.subr.mxu0 0.0
    %470 = vmatpush1.msra.mxu0 %v435
    %471 = vmatprep.subr.mxu0 0.0
    %472 = vmatpush1.msra.mxu0 %v436
    %473 = vmatprep.subr.mxu0 0.0
    %474 = vmatpush1.msra.mxu0 %v437
    %475 = vmatprep.subr.mxu0 0.0
    %476 = vmatpush1.msra.mxu0 %v438
    %477 = vmatprep.subr.mxu0 0.0
    %478 = vmatpush1.msra.mxu0 %v439
    %479 = vmatprep.subr.mxu0 0.0
    %480 = vmatpush1.msra.mxu0 0.0
    %481 = vmatprep.subr.mxu0 0.0
    %482 = vmatpush1.msra.mxu0 0.0
    %483 = vmatprep.subr.mxu0 0.0
    %484 = vmatpush1.msra.mxu0 0.0
    %485 = vmatprep.subr.mxu0 0.0
    %486 = vmatpush1.msra.mxu0 0.0
    %487 = vmatprep.subr.mxu0 0.0
    %488 = vmatpush1.msra.mxu0 0.0
    %489 = vmatprep.subr.mxu0 0.0
    %490 = vmatpush1.msra.mxu0 0.0
    %491 = vmatprep.subr.mxu0 0.0
    %492 = vmatpush1.msra.mxu0 0.0
    %493 = vmatprep.subr.mxu0 0.0
    %494 = vmatpush1.msra.mxu0 0.0
    %495 = vmatprep.subr.mxu0 0.0
    %496 = vmatpush1.msra.mxu0 0.0
    %497 = vmatprep.subr.mxu0 0.0
    %498 = vmatpush1.msra.mxu0 0.0
    %499 = vmatprep.subr.mxu0 0.0
    %500 = vmatpush1.msra.mxu0 0.0
    %501 = vmatprep.subr.mxu0 0.0
    %502 = vmatpush1.msra.mxu0 0.0
    %503 = vmatprep.subr.mxu0 0.0
    %504 = vmatpush1.msra.mxu0 0.0
    %505 = vmatprep.subr.mxu0 0.0
    %506 = vmatpush1.msra.mxu0 0.0
    %507 = vmatprep.subr.mxu0 0.0
    %508 = vmatpush1.msra.mxu0 0.0
    %509 = vmatprep.subr.mxu0 0.0
    %510 = vmatpush1.msra.mxu0 0.0
    %511 = vmatprep.mubr.f32.mxu0 0.0
    %512 = vmatmul.mubr.f32.gmra.mrb[0].mxu0 %v422
    %v513 = vpop.f32.mrb[0].mxu0
    %v514 = vadd.f32 %v445, %v513
    %v515 = vpop.f32.mrb[0].mxu0
    %516 = vmatprep.mubr.f32.mxu0 0.0
    %517 = vmatmul.mubr.f32.gmra.mrb[0].mxu0 %v423
    %v518 = vpop.f32.mrb[0].mxu0
    %v519 = vadd.f32 %v445, %v518
    %v520 = vpop.f32.mrb[0].mxu0
    %521 = vdwg.mxu0
    %v522 = vmul.f32 %v514, 0.2
    %v523 = vmul.f32 %v519, 0.2
    %v524 = vmax.f32 %v514, %v522
    %v525 = vmax.f32 %v519, %v523
    %v526 = vld [vmem:[#allocation11] sm:$0xff]
    %v527 = vld [vmem:[#allocation11 + $0x8] sm:$0xff]
    %v528 = vld [vmem:[#allocation11 + $0x10] sm:$0xff]
    %v529 = vld [vmem:[#allocation11 + $0x18] sm:$0xff]
    %v530 = vld [vmem:[#allocation11 + $0x20] sm:$0xff]
    %v531 = vld [vmem:[#allocation11 + $0x28] sm:$0xff]
    %v532 = vld [vmem:[#allocation11 + $0x30] sm:$0xff]
    %v533 = vld [vmem:[#allocation11 + $0x38] sm:$0xff]
    %v534 = vld [vmem:[#allocation11 + $0x40] sm:$0xff]
    %v535 = vld [vmem:[#allocation11 + $0x48] sm:$0xff]
    %v536 = vld [vmem:[#allocation11 + $0x50] sm:$0xff]
    %v537 = vld [vmem:[#allocation11 + $0x58] sm:$0xff]
    %v538 = vld [vmem:[#allocation11 + $0x60] sm:$0xff]
    %v539 = vld [vmem:[#allocation11 + $0x68] sm:$0xff]
    %v540 = vld [vmem:[#allocation11 + $0x70] sm:$0xff]
    %v541 = vld [vmem:[#allocation11 + $0x78] sm:$0xff]
    %v542 = vld [vmem:[%s10] sm:$0x1]
    %v544 = vlaneseq
    %v545 = vshrl.u32 %v544, 7
    %v546 = vsub.s32 0, %v545
    %v547 = vrot.slane %v542, %v546
    %549 = vmatprep.subr.mxu0 0.0
    %550 = vmatpush1.msra.mxu0 %v526
    %551 = vmatprep.subr.mxu0 0.0
    %552 = vmatpush1.msra.mxu0 %v527
    %553 = vmatprep.subr.mxu0 0.0
    %554 = vmatpush1.msra.mxu0 %v528
    %555 = vmatprep.subr.mxu0 0.0
    %556 = vmatpush1.msra.mxu0 %v529
    %557 = vmatprep.subr.mxu0 0.0
    %558 = vmatpush1.msra.mxu0 %v530
    %559 = vmatprep.subr.mxu0 0.0
    %560 = vmatpush1.msra.mxu0 %v531
    %561 = vmatprep.subr.mxu0 0.0
    %562 = vmatpush1.msra.mxu0 %v532
    %563 = vmatprep.subr.mxu0 0.0
    %564 = vmatpush1.msra.mxu0 %v533
    %565 = vmatprep.subr.mxu0 0.0
    %566 = vmatpush1.msra.mxu0 %v534
    %567 = vmatprep.subr.mxu0 0.0
    %568 = vmatpush1.msra.mxu0 %v535
    %569 = vmatprep.subr.mxu0 0.0
    %570 = vmatpush1.msra.mxu0 %v536
    %571 = vmatprep.subr.mxu0 0.0
    %572 = vmatpush1.msra.mxu0 %v537
    %573 = vmatprep.subr.mxu0 0.0
    %574 = vmatpush1.msra.mxu0 %v538
    %575 = vmatprep.subr.mxu0 0.0
    %576 = vmatpush1.msra.mxu0 %v539
    %577 = vmatprep.subr.mxu0 0.0
    %578 = vmatpush1.msra.mxu0 %v540
    %579 = vmatprep.subr.mxu0 0.0
    %580 = vmatpush1.msra.mxu0 %v541
    %581 = vmatprep.subr.mxu0 0.0
    %582 = vmatpush1.msra.mxu0 0.0
    %583 = vmatprep.subr.mxu0 0.0
    %584 = vmatpush1.msra.mxu0 0.0
    %585 = vmatprep.subr.mxu0 0.0
    %586 = vmatpush1.msra.mxu0 0.0
    %587 = vmatprep.subr.mxu0 0.0
    %588 = vmatpush1.msra.mxu0 0.0
    %589 = vmatprep.subr.mxu0 0.0
    %590 = vmatpush1.msra.mxu0 0.0
    %591 = vmatprep.subr.mxu0 0.0
    %592 = vmatpush1.msra.mxu0 0.0
    %593 = vmatprep.subr.mxu0 0.0
    %594 = vmatpush1.msra.mxu0 0.0
    %595 = vmatprep.subr.mxu0 0.0
    %596 = vmatpush1.msra.mxu0 0.0
    %597 = vmatprep.subr.mxu0 0.0
    %598 = vmatpush1.msra.mxu0 0.0
    %599 = vmatprep.subr.mxu0 0.0
    %600 = vmatpush1.msra.mxu0 0.0
    %601 = vmatprep.subr.mxu0 0.0
    %602 = vmatpush1.msra.mxu0 0.0
    %603 = vmatprep.subr.mxu0 0.0
    %604 = vmatpush1.msra.mxu0 0.0
    %605 = vmatprep.subr.mxu0 0.0
    %606 = vmatpush1.msra.mxu0 0.0
    %607 = vmatprep.subr.mxu0 0.0
    %608 = vmatpush1.msra.mxu0 0.0
    %609 = vmatprep.subr.mxu0 0.0
    %610 = vmatpush1.msra.mxu0 0.0
    %611 = vmatprep.subr.mxu0 0.0
    %612 = vmatpush1.msra.mxu0 0.0
    %613 = vmatprep.mubr.f32.mxu0 0.0
    %614 = vmatmul.mubr.f32.gmra.mrb[0].mxu0 %v524
    %v615 = vpop.f32.mrb[0].mxu0
    %v616 = vadd.f32 %v547, %v615
    %v617 = vpop.f32.mrb[0].mxu0
    %618 = vmatprep.mubr.f32.mxu0 0.0
    %619 = vmatmul.mubr.f32.gmra.mrb[0].mxu0 %v525
    %v620 = vpop.f32.mrb[0].mxu0
    %v621 = vadd.f32 %v547, %v620
    %v622 = vpop.f32.mrb[0].mxu0
    %623 = vdwg.mxu0
    %624 = vst [vmem:[#allocation13] sm:$0xff] %v616
    %625 = vst [vmem:[#allocation13 + $0x8] sm:$0xff] %v621
    // Predicated region
    $region70: #{tpu_custom_call.1} parent=1 // pred_check
      _
    $region71: #{tpu_custom_call.1} parent=1 // pred_check_branch
      %627 = sbr.rel (0) target = $region73
    $region72: #{tpu_custom_call.1} parent=1 // pred_region
      %s629 = ssub.s32 256, 256
      %630 = vsyncadd [#allocation4], %s629
      %s631 = sshll.u32 [#allocation13], 4
      %s632 = int_to_ptr.vmem [resolvable:$true] %s631
      %637 = dma.vmem_to_hbm [thread:$0]  %s632, 256, %s11, [#allocation4], 128, 128, 8
    $region73: #{tpu_custom_call.1} parent=1 // pred_fallthru
      _
    // Predicated region
    $region74: #{tpu_custom_call.1} parent=1 // pred_check
      _
    $region75: #{tpu_custom_call.1} parent=1 // pred_check_branch
      %639 = sbr.rel (0) target = $region77
    $region76: #{tpu_custom_call.1} parent=1 // pred_region
      %640 = dma.done [#allocation4], 256
    $region77: #{tpu_custom_call.1} parent=1 // pred_fallthru
      _
    %641 = vsyncpa [#allocation3], 1
    %642 = vsyncpa [#allocation6], 1
    %643 = vsyncpa [#allocation9], 1
    %644 = vsyncpa [#allocation12], 1
    %645 = vsyncpa [#allocation4], 1

</llo_original>
